<compile_context>
chip_gen: v7x
topology: tpu7x:2x2x1
jax: 0.10.0
libtpu: 0.0.40
codegen_flags: <defaults>
</compile_context>

<pallas_src>
import math

import jax
import jax.numpy as jnp
from jax import lax
from jax.experimental import pallas as pl
from jax.experimental.pallas import tpu as pltpu

_SQRT_HALF = 0.7071067811865476
_LN_EPS = 1e-12


def _erf_approx(x):
    # Abramowitz & Stegun 7.1.26 (max abs error ~1.5e-7). Built only from
    # exp / mul / add / div / where so it lowers cleanly in Mosaic and keeps
    # the exact-erf GELU semantics of F.gelu to ~1e-7.
    a1, a2, a3, a4, a5 = (0.254829592, -0.284496736, 1.421413741,
                          -1.453152027, 1.061405429)
    p = 0.3275911
    ax = jnp.abs(x)
    t = 1.0 / (1.0 + p * ax)
    poly = ((((a5 * t + a4) * t + a3) * t + a2) * t + a1) * t
    y = 1.0 - poly * jnp.exp(-ax * ax)
    return jnp.where(x < 0, -y, y)


def _gelu_exact(x):
    # F.gelu (erf form): x * 0.5 * (1 + erf(x / sqrt(2)))
    return 0.5 * x * (1.0 + _erf_approx(x * _SQRT_HALF))


def _lm_head_kernel(x_ref, w1_ref, b1_ref, g_ref, beta_ref, wd_ref, bd_ref,
                    o_ref, h_ref):
    """One (m-tile, vocab-tile) grid point of the BERT LM prediction head.

    x_ref    : (tm, H)  input hidden-state tile
    w1_ref   : (H, H)   transform dense weight, PyTorch [out, in] layout
    b1_ref   : (1, H)   transform dense bias
    g_ref    : (1, H)   LayerNorm gamma
    beta_ref : (1, H)   LayerNorm beta
    wd_ref   : (tn, H)  decoder (tied embedding) weight tile, [vocab, H]
    bd_ref   : (1, tn)  decoder bias tile
    o_ref    : (tm, tn) output logits tile
    h_ref    : (tm, H)  f32 VMEM scratch: transformed hidden states,
                        persists across the vocab (j) axis.
    """
    j = pl.program_id(1)

    # The transform only depends on the m tile -> compute it once per m tile
    # (j == 0) and reuse it for every vocab tile.
    @pl.when(j == 0)
    def _():
        # y = x @ W1^T + b1 ; contract on in_features so the [out, in] weight
        # is consumed as-is (no wrapper transpose / extra HBM pass).
        y = lax.dot_general(
            x_ref[...], w1_ref[...],
            dimension_numbers=(((1,), (1,)), ((), ())),
            preferred_element_type=jnp.float32,
        )
        y = y + b1_ref[...].astype(jnp.float32)
        y = _gelu_exact(y)
        # LayerNorm over the hidden dim, eps = 1e-12, all in f32.
        mean = jnp.mean(y, axis=-1, keepdims=True)
        cent = y - mean
        var = jnp.mean(cent * cent, axis=-1, keepdims=True)
        y = cent * lax.rsqrt(var + _LN_EPS)
        y = y * g_ref[...].astype(jnp.float32) + beta_ref[...].astype(jnp.float32)
        h_ref[...] = y

    # Decoder: logits = h @ Wd^T + b_d, again contracting on in_features so
    # the [vocab, H] embedding weight streams untransposed.
    h = h_ref[...].astype(wd_ref.dtype)
    logits = lax.dot_general(
        h, wd_ref[...],
        dimension_numbers=(((1,), (1,)), ((), ())),
        preferred_element_type=jnp.float32,
    )
    o_ref[...] = (logits + bd_ref[...].astype(jnp.float32)).astype(o_ref.dtype)


def _round_up(x, m):
    return ((x + m - 1) // m) * m


def bert_lm_prediction_head(hidden_states, w1, b1, gamma, beta,
                            decoder_w, decoder_b, *, tm=None, tn=None):
    """BertLMPredictionHead forward.

    hidden_states : [..., H]
    w1            : [H, H]  transform dense weight (PyTorch [out, in])
    b1            : [H]
    gamma, beta   : [H]     LayerNorm affine params
    decoder_w     : [V, H]  tied embedding weight (PyTorch [out, in])
    decoder_b     : [V]
    Returns logits [..., V].
    """
    *lead, H = hidden_states.shape
    V = decoder_w.shape[0]
    out_dtype = hidden_states.dtype

    # Flatten leading dims (metadata-only reshape, no copy).
    x = hidden_states.reshape(-1, H)
    M = x.shape[0]

    # Tile sizes: sublane-aligned M tiles, lane-dense vocab tiles. Defaults
    # (tm<=256, tn<=512) keep double-buffered VMEM comfortably inside the
    # scoped default even for H=1024 f32.
    if tm is None:
        tm = 256 if M >= 256 else _round_up(M, 8)
    if tn is None:
        tn = 512 if V >= 512 else _round_up(V, 128)
    tm = max(8, _round_up(tm, 8))
    tn = max(128, _round_up(tn, 128)) if V >= 128 else V

    Mp = _round_up(M, tm)
    Vp = _round_up(V, tn)

    if Mp != M:
        x = jnp.pad(x, ((0, Mp - M), (0, 0)))
    wd = decoder_w
    bd = decoder_b
    if Vp != V:
        # One extra HBM pass over the embedding weight only when V % tn != 0.
        wd = jnp.pad(wd, ((0, Vp - V), (0, 0)))
        bd = jnp.pad(bd, ((0, Vp - V),))

    b1_2d = b1.reshape(1, H)
    g_2d = gamma.reshape(1, H)
    beta_2d = beta.reshape(1, H)
    bd_2d = bd.reshape(1, Vp)

    grid = (Mp // tm, Vp // tn)

    out = pl.pallas_call(
        _lm_head_kernel,
        out_shape=jax.ShapeDtypeStruct((Mp, Vp), out_dtype),
        grid_spec=pltpu.PrefetchScalarGridSpec(
            num_scalar_prefetch=0,
            grid=grid,
            in_specs=[
                pl.BlockSpec((tm, H), lambda i, j: (i, 0)),   # x tile
                pl.BlockSpec((H, H), lambda i, j: (0, 0)),    # W1 (resident)
                pl.BlockSpec((1, H), lambda i, j: (0, 0)),    # b1
                pl.BlockSpec((1, H), lambda i, j: (0, 0)),    # gamma
                pl.BlockSpec((1, H), lambda i, j: (0, 0)),    # beta
                pl.BlockSpec((tn, H), lambda i, j: (j, 0)),   # decoder weight tile
                pl.BlockSpec((1, tn), lambda i, j: (0, j)),   # decoder bias tile
            ],
            out_specs=pl.BlockSpec((tm, tn), lambda i, j: (i, j)),
            scratch_shapes=[pltpu.VMEM((tm, H), jnp.float32)],
        ),
        compiler_params=pltpu.CompilerParams(
            # M tiles are independent -> shard across TensorCores (v7x).
            # Vocab axis must stay sequential per M tile (scratch reuse).
            dimension_semantics=("parallel", "arbitrary"),
        ),
    )(x, w1, b1_2d, g_2d, beta_2d, wd, bd_2d)

    out = out[:M, :V]
    return out.reshape(*lead, V)


def _init_params(key, hidden_size, vocab_size, dtype=jnp.float32):
    """Deterministic init matching the module's parameter shapes."""
    k_w1, k_b1, k_g, k_be, k_wd, k_bd = jax.random.split(key, 6)
    bound = 1.0 / math.sqrt(hidden_size)          # kaiming_uniform_(a=sqrt(5))
    w1 = jax.random.uniform(k_w1, (hidden_size, hidden_size), dtype, -bound, bound)
    b1 = jax.random.uniform(k_b1, (hidden_size,), dtype, -bound, bound)
    gamma = 1.0 + 0.1 * jax.random.normal(k_g, (hidden_size,), dtype)
    beta = 0.1 * jax.random.normal(k_be, (hidden_size,), dtype)
    decoder_w = 0.05 * jax.random.normal(k_wd, (vocab_size, hidden_size), dtype)
    decoder_b = 0.05 * jax.random.normal(k_bd, (vocab_size,), dtype)
    return w1, b1, gamma, beta, decoder_w, decoder_b


if __name__ == "__main__":
    key = jax.random.PRNGKey(0)
    k_x, k_p = jax.random.split(key)

    B, S, H, V = 2, 8, 32, 256
    hidden_states = jax.random.normal(k_x, (B, S, H), dtype=jnp.float32)
    w1, b1, gamma, beta, decoder_w, decoder_b = _init_params(k_p, H, V)

    # Small tiles to exercise a real multi-block grid: (Mp//tm, Vp//tn) = (2, 2).
    out = bert_lm_prediction_head(hidden_states, w1, b1, gamma, beta,
                                  decoder_w, decoder_b, tm=8, tn=128)
    out = jax.block_until_ready(out)

    # Pure-JAX reference (exact erf GELU, as in F.gelu).
    x2 = hidden_states.reshape(-1, H)
    y = x2 @ w1.T + b1
    y = jax.nn.gelu(y, approximate=False)
    mean = y.mean(-1, keepdims=True)
    var = ((y - mean) ** 2).mean(-1, keepdims=True)
    y = (y - mean) / jnp.sqrt(var + 1e-12)
    y = y * gamma + beta
    ref = (y @ decoder_w.T + decoder_b).reshape(B, S, V)

    assert out.shape == (B, S, V), out.shape
    assert jnp.allclose(out, ref, atol=1e-4, rtol=1e-4), float(
        jnp.max(jnp.abs(out - ref)))

    print("KERNEL_OK")
</pallas_src>

<mosaic_0001>
module attributes {stable_mosaic.version = 11 : i64} {
  func.func @_lm_head_kernel(%arg0: i32, %arg1: i32, %arg2: memref<8x32xf32, #tpu.memory_space<vmem>>, %arg3: memref<32x32xf32, #tpu.memory_space<vmem>>, %arg4: memref<1x32xf32, #tpu.memory_space<vmem>>, %arg5: memref<1x32xf32, #tpu.memory_space<vmem>>, %arg6: memref<1x32xf32, #tpu.memory_space<vmem>>, %arg7: memref<128x32xf32, #tpu.memory_space<vmem>>, %arg8: memref<1x128xf32, #tpu.memory_space<vmem>>, %arg9: memref<8x128xf32, #tpu.memory_space<vmem>>, %arg10: memref<8x32xf32, #tpu.memory_space<vmem>>) attributes {dimension_semantics = [#tpu.dimension_semantics<parallel>, #tpu.dimension_semantics<arbitrary>], iteration_bounds = array<i64: 2, 2>, scalar_prefetch = 0 : i64, scratch_operands = 1 : i64, tpu.core_type = #tpu.core_type<tc>, window_params = [{transform_indices = @transform_0, window_bounds = array<i64: 8, 32>}, {pipeline_mode = #tpu.pipeline_mode<synchronous>, transform_indices = @transform_1, window_bounds = array<i64: 32, 32>}, {pipeline_mode = #tpu.pipeline_mode<synchronous>, transform_indices = @transform_2, window_bounds = array<i64: 1, 32>}, {pipeline_mode = #tpu.pipeline_mode<synchronous>, transform_indices = @transform_3, window_bounds = array<i64: 1, 32>}, {pipeline_mode = #tpu.pipeline_mode<synchronous>, transform_indices = @transform_4, window_bounds = array<i64: 1, 32>}, {transform_indices = @transform_5, window_bounds = array<i64: 128, 32>}, {transform_indices = @transform_6, window_bounds = array<i64: 1, 128>}, {transform_indices = @transform_7, window_bounds = array<i64: 8, 128>}]} {
    %c0_i32 = arith.constant 0 : i32
    %0 = arith.cmpi eq, %arg1, %c0_i32 : i32
    %1 = arith.extui %0 : i1 to i32
    %c0_i32_0 = arith.constant 0 : i32
    %2 = arith.cmpi ne, %1, %c0_i32_0 : i32
    scf.if %2 {
      %c0_8 = arith.constant 0 : index
      %c0_9 = arith.constant 0 : index
      %10 = vector.load %arg2[%c0_8, %c0_9] : memref<8x32xf32, #tpu.memory_space<vmem>>, vector<8x32xf32>
      %c0_10 = arith.constant 0 : index
      %c0_11 = arith.constant 0 : index
      %11 = vector.load %arg3[%c0_10, %c0_11] : memref<32x32xf32, #tpu.memory_space<vmem>>, vector<32x32xf32>
      %cst_12 = arith.constant dense<0.000000e+00> : vector<8x32xf32>
      %12 = tpu.matmul %10, %11, %cst_12 {dimension_numbers = #tpu.dot_dimension_numbers<[1], [1], [0], [0], [0, 0, 1, 0], [], []>} : vector<8x32xf32>, vector<32x32xf32>, vector<8x32xf32> -> vector<8x32xf32>
      %c0_13 = arith.constant 0 : index
      %c0_14 = arith.constant 0 : index
      %13 = vector.load %arg4[%c0_13, %c0_14] : memref<1x32xf32, #tpu.memory_space<vmem>>, vector<1x32xf32>
      %14 = vector.broadcast %13 : vector<1x32xf32> to vector<8x32xf32>
      %15 = arith.addf %12, %14 : vector<8x32xf32>
      %cst_15 = arith.constant 5.000000e-01 : f32
      %16 = vector.broadcast %cst_15 : f32 to vector<8x32xf32>
      %17 = arith.mulf %16, %15 : vector<8x32xf32>
      %cst_16 = arith.constant 0.707106769 : f32
      %18 = vector.broadcast %cst_16 : f32 to vector<8x32xf32>
      %19 = arith.mulf %15, %18 : vector<8x32xf32>
      %20 = math.absf %19 : vector<8x32xf32>
      %cst_17 = arith.constant 0.327591091 : f32
      %21 = vector.broadcast %cst_17 : f32 to vector<8x32xf32>
      %22 = arith.mulf %21, %20 : vector<8x32xf32>
      %cst_18 = arith.constant 1.000000e+00 : f32
      %23 = vector.broadcast %cst_18 : f32 to vector<8x32xf32>
      %24 = arith.addf %23, %22 : vector<8x32xf32>
      %cst_19 = arith.constant 1.000000e+00 : f32
      %25 = vector.broadcast %cst_19 : f32 to vector<8x32xf32>
      %26 = arith.divf %25, %24 : vector<8x32xf32>
      %cst_20 = arith.constant 1.06140542 : f32
      %27 = vector.broadcast %cst_20 : f32 to vector<8x32xf32>
      %28 = arith.mulf %27, %26 : vector<8x32xf32>
      %cst_21 = arith.constant -1.45315206 : f32
      %29 = vector.broadcast %cst_21 : f32 to vector<8x32xf32>
      %30 = arith.addf %28, %29 : vector<8x32xf32>
      %31 = arith.mulf %30, %26 : vector<8x32xf32>
      %cst_22 = arith.constant 1.42141378 : f32
      %32 = vector.broadcast %cst_22 : f32 to vector<8x32xf32>
      %33 = arith.addf %31, %32 : vector<8x32xf32>
      %34 = arith.mulf %33, %26 : vector<8x32xf32>
      %cst_23 = arith.constant -0.284496725 : f32
      %35 = vector.broadcast %cst_23 : f32 to vector<8x32xf32>
      %36 = arith.addf %34, %35 : vector<8x32xf32>
      %37 = arith.mulf %36, %26 : vector<8x32xf32>
      %cst_24 = arith.constant 0.254829586 : f32
      %38 = vector.broadcast %cst_24 : f32 to vector<8x32xf32>
      %39 = arith.addf %37, %38 : vector<8x32xf32>
      %40 = arith.mulf %39, %26 : vector<8x32xf32>
      %cst_25 = arith.constant 0.000000e+00 : f32
      %41 = vector.broadcast %cst_25 : f32 to vector<8x32xf32>
      %42 = arith.subf %41, %20 : vector<8x32xf32>
      %43 = arith.mulf %42, %20 : vector<8x32xf32>
      %44 = math.exp %43 : vector<8x32xf32>
      %45 = arith.mulf %40, %44 : vector<8x32xf32>
      %cst_26 = arith.constant 1.000000e+00 : f32
      %46 = vector.broadcast %cst_26 : f32 to vector<8x32xf32>
      %47 = arith.subf %46, %45 : vector<8x32xf32>
      %cst_27 = arith.constant 0.000000e+00 : f32
      %48 = vector.broadcast %cst_27 : f32 to vector<8x32xf32>
      %49 = arith.cmpf olt, %19, %48 : vector<8x32xf32>
      %cst_28 = arith.constant 0.000000e+00 : f32
      %50 = vector.broadcast %cst_28 : f32 to vector<8x32xf32>
      %51 = arith.subf %50, %47 : vector<8x32xf32>
      %52 = arith.select %49, %51, %47 : vector<8x32xi1>, vector<8x32xf32>
      %cst_29 = arith.constant 1.000000e+00 : f32
      %53 = vector.broadcast %cst_29 : f32 to vector<8x32xf32>
      %54 = arith.addf %53, %52 : vector<8x32xf32>
      %55 = arith.mulf %17, %54 : vector<8x32xf32>
      %cst_30 = arith.constant dense<0.000000e+00> : vector<8xf32>
      %56 = vector.multi_reduction <add>, %55, %cst_30 [1] : vector<8x32xf32> to vector<8xf32>
      %57 = vector.shape_cast %56 : vector<8xf32> to vector<8x1xf32>
      %cst_31 = arith.constant 3.200000e+01 : f32
      %58 = vector.broadcast %cst_31 : f32 to vector<8x1xf32>
      %59 = arith.divf %57, %58 : vector<8x1xf32>
      %60 = vector.broadcast %59 : vector<8x1xf32> to vector<8x32xf32>
      %61 = arith.subf %55, %60 : vector<8x32xf32>
      %62 = arith.mulf %61, %61 : vector<8x32xf32>
      %cst_32 = arith.constant dense<0.000000e+00> : vector<8xf32>
      %63 = vector.multi_reduction <add>, %62, %cst_32 [1] : vector<8x32xf32> to vector<8xf32>
      %64 = vector.shape_cast %63 : vector<8xf32> to vector<8x1xf32>
      %cst_33 = arith.constant 3.200000e+01 : f32
      %65 = vector.broadcast %cst_33 : f32 to vector<8x1xf32>
      %66 = arith.divf %64, %65 : vector<8x1xf32>
      %cst_34 = arith.constant 9.99999996E-13 : f32
      %67 = vector.broadcast %cst_34 : f32 to vector<8x1xf32>
      %68 = arith.addf %66, %67 : vector<8x1xf32>
      %69 = math.rsqrt %68 : vector<8x1xf32>
      %70 = vector.broadcast %69 : vector<8x1xf32> to vector<8x32xf32>
      %71 = arith.mulf %61, %70 : vector<8x32xf32>
      %c0_35 = arith.constant 0 : index
      %c0_36 = arith.constant 0 : index
      %72 = vector.load %arg5[%c0_35, %c0_36] : memref<1x32xf32, #tpu.memory_space<vmem>>, vector<1x32xf32>
      %73 = vector.broadcast %72 : vector<1x32xf32> to vector<8x32xf32>
      %74 = arith.mulf %71, %73 : vector<8x32xf32>
      %c0_37 = arith.constant 0 : index
      %c0_38 = arith.constant 0 : index
      %75 = vector.load %arg6[%c0_37, %c0_38] : memref<1x32xf32, #tpu.memory_space<vmem>>, vector<1x32xf32>
      %76 = vector.broadcast %75 : vector<1x32xf32> to vector<8x32xf32>
      %77 = arith.addf %74, %76 : vector<8x32xf32>
      %c0_39 = arith.constant 0 : index
      %c0_40 = arith.constant 0 : index
      %78 = vector.load %arg10[%c0_39, %c0_40] : memref<8x32xf32, #tpu.memory_space<vmem>>, vector<8x32xf32>
      tpu.vector_store %arg10[%c0_39, %c0_40], %77 {strides = array<i32>} : memref<8x32xf32, #tpu.memory_space<vmem>>, vector<8x32xf32>,
    } else {
    }
    %c0 = arith.constant 0 : index
    %c0_1 = arith.constant 0 : index
    %3 = vector.load %arg10[%c0, %c0_1] : memref<8x32xf32, #tpu.memory_space<vmem>>, vector<8x32xf32>
    %c0_2 = arith.constant 0 : index
    %c0_3 = arith.constant 0 : index
    %4 = vector.load %arg7[%c0_2, %c0_3] : memref<128x32xf32, #tpu.memory_space<vmem>>, vector<128x32xf32>
    %cst = arith.constant dense<0.000000e+00> : vector<8x128xf32>
    %5 = tpu.matmul %3, %4, %cst {dimension_numbers = #tpu.dot_dimension_numbers<[1], [1], [0], [0], [0, 0, 1, 0], [], []>} : vector<8x32xf32>, vector<128x32xf32>, vector<8x128xf32> -> vector<8x128xf32>
    %c0_4 = arith.constant 0 : index
    %c0_5 = arith.constant 0 : index
    %6 = vector.load %arg8[%c0_4, %c0_5] : memref<1x128xf32, #tpu.memory_space<vmem>>, vector<1x128xf32>
    %7 = vector.broadcast %6 : vector<1x128xf32> to vector<8x128xf32>
    %8 = arith.addf %5, %7 : vector<8x128xf32>
    %c0_6 = arith.constant 0 : index
    %c0_7 = arith.constant 0 : index
    %9 = vector.load %arg9[%c0_6, %c0_7] : memref<8x128xf32, #tpu.memory_space<vmem>>, vector<8x128xf32>
    tpu.vector_store %arg9[%c0_6, %c0_7], %8 {strides = array<i32>} : memref<8x128xf32, #tpu.memory_space<vmem>>, vector<8x128xf32>,
    return
  }
  func.func @transform_0(%arg0: i32, %arg1: i32) -> (i32, i32) {
    %c0_i32 = arith.constant 0 : i32
    %c0_i32_0 = arith.constant 0 : i32
    return %arg0, %c0_i32 : i32, i32
  }
  func.func @transform_1(%arg0: i32, %arg1: i32) -> (i32, i32) {
    %c0_i32 = arith.constant 0 : i32
    %c0_i32_0 = arith.constant 0 : i32
    %c0_i32_1 = arith.constant 0 : i32
    return %c0_i32, %c0_i32_0 : i32, i32
  }
  func.func @transform_2(%arg0: i32, %arg1: i32) -> (i32, i32) {
    %c0_i32 = arith.constant 0 : i32
    %c0_i32_0 = arith.constant 0 : i32
    %c0_i32_1 = arith.constant 0 : i32
    return %c0_i32, %c0_i32_0 : i32, i32
  }
  func.func @transform_3(%arg0: i32, %arg1: i32) -> (i32, i32) {
    %c0_i32 = arith.constant 0 : i32
    %c0_i32_0 = arith.constant 0 : i32
    %c0_i32_1 = arith.constant 0 : i32
    return %c0_i32, %c0_i32_0 : i32, i32
  }
  func.func @transform_4(%arg0: i32, %arg1: i32) -> (i32, i32) {
    %c0_i32 = arith.constant 0 : i32
    %c0_i32_0 = arith.constant 0 : i32
    %c0_i32_1 = arith.constant 0 : i32
    return %c0_i32, %c0_i32_0 : i32, i32
  }
  func.func @transform_5(%arg0: i32, %arg1: i32) -> (i32, i32) {
    %c0_i32 = arith.constant 0 : i32
    %c0_i32_0 = arith.constant 0 : i32
    return %arg1, %c0_i32 : i32, i32
  }
  func.func @transform_6(%arg0: i32, %arg1: i32) -> (i32, i32) {
    %c0_i32 = arith.constant 0 : i32
    %c0_i32_0 = arith.constant 0 : i32
    return %c0_i32, %arg1 : i32, i32
  }
  func.func @transform_7(%arg0: i32, %arg1: i32) -> (i32, i32) {
    %c0_i32 = arith.constant 0 : i32
    return %arg0, %arg1 : i32, i32
  }
}

</mosaic_0001>

<llo_original>
// kernel: tpu_custom_call.1
$region0: #{tpu_custom_call.1}
  #allocation0 [shape = 'u32[]', space=smem, size = 0x4, offset = 0x4, fixed_abs, tag = 'smem constant byte address 0x4 - core index']
  #allocation1 [shape = 'u32[144,128]{1,0:T(1,128)}', space=vmem, size = 0x12000, scoped, tag = 'internal scratch']
  #allocation2 [shape = 'f32[8,32]{1,0:T(8,128)}', space=vmem, size = 0x1000, scoped, tag = 'scratch operand']
  %s0 = inlined_call_operand.vmem [shape: f32[16,32], index: 0, kind: input, shape index: {}]
  %s1 = inlined_call_operand.vmem [shape: f32[32,32], index: 1, kind: input, shape index: {}]
  %s2 = inlined_call_operand.vmem [shape: f32[1,32], index: 2, kind: input, shape index: {}]
  %s3 = inlined_call_operand.vmem [shape: f32[1,32], index: 3, kind: input, shape index: {}]
  %s4 = inlined_call_operand.vmem [shape: f32[1,32], index: 4, kind: input, shape index: {}]
  %s5 = inlined_call_operand.vmem [shape: f32[256,32], index: 5, kind: input, shape index: {}]
  %s6 = inlined_call_operand.vmem [shape: f32[1,256], index: 6, kind: input, shape index: {}]
  %s7 = inlined_call_operand.hbm [shape: f32[16,256], index: 7, kind: output, shape index: {}]
  %s8 = sld [smem:[#allocation0]]
  $region65: #{tpu_custom_call.1} parent=0
    _
  %s10 = ssub.s32 1, %s8
  %s11 = scalar_select 0, %s10, %s8
  $region1: #{tpu_custom_call.1} parent=0
    #allocation3 [shape = 'u8[8192]{0}', space=vmem, size = 0x2000, scoped, tag = 'output window, operand 0']
    #allocation4 [shape = 's32[2]{0}', space=sflag, size = 0x8, scoped, tag = 'scoped memory for tpu_custom_call.1']
    %12 = vsyncpa [#allocation4], 0
    %s13 = scalar_lea.sflag [#allocation4], 1
    %14 = vsyncpa %s13, 0
    loop: start=0, step=1, limit=6
    $region2: #{tpu_custom_call.1} parent=1 // loop_pre_header
      _
    $region3: #{tpu_custom_call.1} parent=1 // loop_header
      %s16 = sphi 0, %s20
      %p17 = scmp.ge.s32.totalorder %s16, 6
      %s23 = sphi 0, %s35
      %s24 = sphi 0, %s31
      %s25 = sphi 0, %s23
      %s26 = sphi 0, %s24
      %s27 = sphi 0, %s25
      %s28 = sphi 0, %s26
      %s38 = sphi 0, %s40
      %s41 = sphi 0, %s38
      %s42 = sphi 0, %s41
      %s58 = sphi 0, %s42
      %s62 = sphi 0, %s62
      %s64 = sphi 0, %s62
      %s65 = sphi 0, %s64
      %s79 = sphi 0, %s65
      %s83 = sphi 0, %s83
      %s85 = sphi 0, %s83
      %s86 = sphi 0, %s85
      %s100 = sphi 0, %s86
      %s104 = sphi 0, %s104
      %s106 = sphi 0, %s104
      %s107 = sphi 0, %s106
      %s121 = sphi 0, %s107
      %s125 = sphi 0, %s125
      %s127 = sphi 0, %s125
      %s128 = sphi 0, %s127
      %s142 = sphi 0, %s128
      %s148 = sphi 0, %s150
      %s151 = sphi 0, %s148
      %s152 = sphi 0, %s151
      %s168 = sphi 0, %s152
      %s174 = sphi 0, %s176
      %s177 = sphi 0, %s174
      %s178 = sphi 0, %s177
      %s194 = sphi 0, %s178
      %s202 = sphi 0, %s204
      %s205 = sphi 0, %s202
      %s206 = sphi 0, %s205
      %s222 = sphi 0, %s206
    $region4: #{tpu_custom_call.1} parent=1 // loop_header_branch
      %19 = sbr.rel (%p17) target = $region8
    $region5: #{tpu_custom_call.1} parent=1 // loop_body
      %s21 = ssub.s32 %s16, 1
      %s22 = ssub.s32 %s16, 2
      %s29 = sadd.s32 1, %s24
      %p30 = scmp.ge.s32.totalorder %s29, 2
      %s31 = scalar_select %p30, 0, %s29
      %s32 = sadd.s32 1, %s23
      %s33 = scalar_select %p30, %s32, %s23
      %p34 = scmp.ge.s32.totalorder %s33, 2
      %s35 = scalar_select %p34, 0, %s33
      %s36 = ssub.s32 %s23, %s35
      %p37 = scmp.eq.s32.totalorder %s36, 0
      %s39 = sadd.s32 %s38, 1
      %s40 = scalar_select %p37, %s38, %s39
      %p43 = pneg %p37
      %p44 = scmp.eq.s32.totalorder %s16, 3
      %p45 = por %p43, %p44
      %p46 = scmp.ne.s32.totalorder %s38, %s41
      %p47 = scmp.eq.s32.totalorder %s16, 0
      %p48 = por %p46, %p47
      %p49 = scmp.ne.s32.totalorder %s38, %s41
      %p50 = scmp.eq.s32.totalorder %s21, 3
      %p51 = por %p49, %p50
      %p52 = scmp.ne.s32.totalorder %s41, %s42
      %p53 = scmp.eq.s32.totalorder %s21, 0
      %p54 = por %p52, %p53
      %p55 = scmp.ne.s32.totalorder %s41, %s42
      %p56 = scmp.eq.s32.totalorder %s22, 3
      %p57 = por %p55, %p56
      %p59 = scmp.ne.s32.totalorder %s42, %s58
      %p60 = scmp.eq.s32.totalorder %s22, 0
      %p61 = por %p59, %p60
      %s63 = sadd.s32 %s62, 1
      %p66 = scmp.eq.s32.totalorder %s16, 3
      %p67 = scmp.ne.s32.totalorder %s62, %s64
      %p68 = scmp.eq.s32.totalorder %s16, 0
      %p69 = por %p67, %p68
      %p70 = scmp.ne.s32.totalorder %s62, %s64
      %p71 = scmp.eq.s32.totalorder %s21, 3
      %p72 = por %p70, %p71
      %p73 = scmp.ne.s32.totalorder %s64, %s65
      %p74 = scmp.eq.s32.totalorder %s21, 0
      %p75 = por %p73, %p74
      %p76 = scmp.ne.s32.totalorder %s64, %s65
      %p77 = scmp.eq.s32.totalorder %s22, 3
      %p78 = por %p76, %p77
      %p80 = scmp.ne.s32.totalorder %s65, %s79
      %p81 = scmp.eq.s32.totalorder %s22, 0
      %p82 = por %p80, %p81
      %s84 = sadd.s32 %s83, 1
      %p87 = scmp.eq.s32.totalorder %s16, 3
      %p88 = scmp.ne.s32.totalorder %s83, %s85
      %p89 = scmp.eq.s32.totalorder %s16, 0
      %p90 = por %p88, %p89
      %p91 = scmp.ne.s32.totalorder %s83, %s85
      %p92 = scmp.eq.s32.totalorder %s21, 3
      %p93 = por %p91, %p92
      %p94 = scmp.ne.s32.totalorder %s85, %s86
      %p95 = scmp.eq.s32.totalorder %s21, 0
      %p96 = por %p94, %p95
      %p97 = scmp.ne.s32.totalorder %s85, %s86
      %p98 = scmp.eq.s32.totalorder %s22, 3
      %p99 = por %p97, %p98
      %p101 = scmp.ne.s32.totalorder %s86, %s100
      %p102 = scmp.eq.s32.totalorder %s22, 0
      %p103 = por %p101, %p102
      %s105 = sadd.s32 %s104, 1
      %p108 = scmp.eq.s32.totalorder %s16, 3
      %p109 = scmp.ne.s32.totalorder %s104, %s106
      %p110 = scmp.eq.s32.totalorder %s16, 0
      %p111 = por %p109, %p110
      %p112 = scmp.ne.s32.totalorder %s104, %s106
      %p113 = scmp.eq.s32.totalorder %s21, 3
      %p114 = por %p112, %p113
      %p115 = scmp.ne.s32.totalorder %s106, %s107
      %p116 = scmp.eq.s32.totalorder %s21, 0
      %p117 = por %p115, %p116
      %p118 = scmp.ne.s32.totalorder %s106, %s107
      %p119 = scmp.eq.s32.totalorder %s22, 3
      %p120 = por %p118, %p119
      %p122 = scmp.ne.s32.totalorder %s107, %s121
      %p123 = scmp.eq.s32.totalorder %s22, 0
      %p124 = por %p122, %p123
      %s126 = sadd.s32 %s125, 1
      %p129 = scmp.eq.s32.totalorder %s16, 3
      %p130 = scmp.ne.s32.totalorder %s125, %s127
      %p131 = scmp.eq.s32.totalorder %s16, 0
      %p132 = por %p130, %p131
      %p133 = scmp.ne.s32.totalorder %s125, %s127
      %p134 = scmp.eq.s32.totalorder %s21, 3
      %p135 = por %p133, %p134
      %p136 = scmp.ne.s32.totalorder %s127, %s128
      %p137 = scmp.eq.s32.totalorder %s21, 0
      %p138 = por %p136, %p137
      %p139 = scmp.ne.s32.totalorder %s127, %s128
      %p140 = scmp.eq.s32.totalorder %s22, 3
      %p141 = por %p139, %p140
      %p143 = scmp.ne.s32.totalorder %s128, %s142
      %p144 = scmp.eq.s32.totalorder %s22, 0
      %p145 = por %p143, %p144
      %s146 = ssub.s32 %s24, %s31
      %p147 = scmp.eq.s32.totalorder %s146, 0
      %s149 = sadd.s32 %s148, 1
      %s150 = scalar_select %p147, %s148, %s149
      %p153 = pneg %p147
      %p154 = scmp.eq.s32.totalorder %s16, 3
      %p155 = por %p153, %p154
      %p156 = scmp.ne.s32.totalorder %s148, %s151
      %p157 = scmp.eq.s32.totalorder %s16, 0
      %p158 = por %p156, %p157
      %p159 = scmp.ne.s32.totalorder %s148, %s151
      %p160 = scmp.eq.s32.totalorder %s21, 3
      %p161 = por %p159, %p160
      %p162 = scmp.ne.s32.totalorder %s151, %s152
      %p163 = scmp.eq.s32.totalorder %s21, 0
      %p164 = por %p162, %p163
      %p165 = scmp.ne.s32.totalorder %s151, %s152
      %p166 = scmp.eq.s32.totalorder %s22, 3
      %p167 = por %p165, %p166
      %p169 = scmp.ne.s32.totalorder %s152, %s168
      %p170 = scmp.eq.s32.totalorder %s22, 0
      %p171 = por %p169, %p170
      %s172 = ssub.s32 %s24, %s31
      %p173 = scmp.eq.s32.totalorder %s172, 0
      %s175 = sadd.s32 %s174, 1
      %s176 = scalar_select %p173, %s174, %s175
      %p179 = pneg %p173
      %p180 = scmp.eq.s32.totalorder %s16, 3
      %p181 = por %p179, %p180
      %p182 = scmp.ne.s32.totalorder %s174, %s177
      %p183 = scmp.eq.s32.totalorder %s16, 0
      %p184 = por %p182, %p183
      %p185 = scmp.ne.s32.totalorder %s174, %s177
      %p186 = scmp.eq.s32.totalorder %s21, 3
      %p187 = por %p185, %p186
      %p188 = scmp.ne.s32.totalorder %s177, %s178
      %p189 = scmp.eq.s32.totalorder %s21, 0
      %p190 = por %p188, %p189
      %p191 = scmp.ne.s32.totalorder %s177, %s178
      %p192 = scmp.eq.s32.totalorder %s22, 3
      %p193 = por %p191, %p192
      %p195 = scmp.ne.s32.totalorder %s178, %s194
      %p196 = scmp.eq.s32.totalorder %s22, 0
      %p197 = por %p195, %p196
      %s198 = ssub.s32 %s23, %s35
      %s199 = ssub.s32 %s24, %s31
      %s200 = sor.u32 %s198, %s199
      %p201 = scmp.eq.s32.totalorder %s200, 0
      %s203 = sadd.s32 %s202, 1
      %s204 = scalar_select %p201, %s202, %s203
      %p207 = pneg %p201
      %p208 = scmp.eq.s32.totalorder %s16, 3
      %p209 = por %p207, %p208
      %p210 = scmp.ne.s32.totalorder %s202, %s205
      %p211 = scmp.eq.s32.totalorder %s16, 0
      %p212 = por %p210, %p211
      %p213 = scmp.ne.s32.totalorder %s202, %s205
      %p214 = scmp.eq.s32.totalorder %s21, 3
      %p215 = por %p213, %p214
      %p216 = scmp.ne.s32.totalorder %s205, %s206
      %p217 = scmp.eq.s32.totalorder %s21, 0
      %p218 = por %p216, %p217
      %p219 = scmp.ne.s32.totalorder %s205, %s206
      %p220 = scmp.eq.s32.totalorder %s22, 3
      %p221 = por %p219, %p220
      %p223 = scmp.ne.s32.totalorder %s206, %s222
      %p224 = scmp.eq.s32.totalorder %s22, 0
      %p225 = por %p223, %p224
      %p226 = scmp.le.s32.totalorder 1, %s16
      %p227 = scmp.lt.s32.totalorder %s16, 5
      %p228 = pnand %p226, %p227
      %p229 = pneg %p228
      // Predicated region
      $region9: #{tpu_custom_call.1} parent=5 // pred_check
        _
      $region10: #{tpu_custom_call.1} parent=5 // pred_check_branch
        %231 = sbr.rel (%p228) target = $region12
      $region11: #{tpu_custom_call.1} parent=5 // pred_region
        %s232 = ssub.s32 %s16, 1
        // Predicated region
        $region13: #{tpu_custom_call.1} parent=11 // pred_check
          %p233 = pneg %p75
        $region14: #{tpu_custom_call.1} parent=11 // pred_check_branch
          %235 = sbr.rel (%p233) target = $region16
        $region15: #{tpu_custom_call.1} parent=11 // pred_region
          _
        $region16: #{tpu_custom_call.1} parent=11 // pred_fallthru
          _
        // Predicated region
        $region17: #{tpu_custom_call.1} parent=11 // pred_check
          %p236 = pneg %p96
        $region18: #{tpu_custom_call.1} parent=11 // pred_check_branch
          %238 = sbr.rel (%p236) target = $region20
        $region19: #{tpu_custom_call.1} parent=11 // pred_region
          _
        $region20: #{tpu_custom_call.1} parent=11 // pred_fallthru
          _
        // Predicated region
        $region21: #{tpu_custom_call.1} parent=11 // pred_check
          %p239 = pneg %p117
        $region22: #{tpu_custom_call.1} parent=11 // pred_check_branch
          %241 = sbr.rel (%p239) target = $region24
        $region23: #{tpu_custom_call.1} parent=11 // pred_region
          _
        $region24: #{tpu_custom_call.1} parent=11 // pred_fallthru
          _
        // Predicated region
        $region25: #{tpu_custom_call.1} parent=11 // pred_check
          %p242 = pneg %p138
        $region26: #{tpu_custom_call.1} parent=11 // pred_check_branch
          %244 = sbr.rel (%p242) target = $region28
        $region27: #{tpu_custom_call.1} parent=11 // pred_region
          _
        $region28: #{tpu_custom_call.1} parent=11 // pred_fallthru
          _
      $region12: #{tpu_custom_call.1} parent=5 // pred_fallthru
        _
      %p245 = scmp.lt.s32.totalorder %s16, 4
      // Predicated region
      $region29: #{tpu_custom_call.1} parent=5 // pred_check
        %p246 = pneg %p245
      $region30: #{tpu_custom_call.1} parent=5 // pred_check_branch
        %248 = sbr.rel (%p246) target = $region32
      $region31: #{tpu_custom_call.1} parent=5 // pred_region
        // Predicated region
        $region33: #{tpu_custom_call.1} parent=31 // pred_check
          %p249 = pneg %p48
        $region34: #{tpu_custom_call.1} parent=31 // pred_check_branch
          %251 = sbr.rel (%p249) target = $region36
        $region35: #{tpu_custom_call.1} parent=31 // pred_region
          %p252 = scmp.lt.s32.totalorder %s23, 1
          %s253 = scalar_select %p252, %s23, 1
          %s254 = smul.addr %s253, 8
          %s255 = scalar_lea.vmem %s0, %s254
        $region36: #{tpu_custom_call.1} parent=31 // pred_fallthru
          _
        // Predicated region
        $region37: #{tpu_custom_call.1} parent=31 // pred_check
          %p256 = pneg %p158
        $region38: #{tpu_custom_call.1} parent=31 // pred_check_branch
          %258 = sbr.rel (%p256) target = $region40
        $region39: #{tpu_custom_call.1} parent=31 // pred_region
          %s259 = smul.u32 16, %s24
          %p260 = scmp.lt.s32.totalorder %s259, 31
          %s261 = scalar_select %p260, %s259, 31
          %s262 = smul.addr %s261, 8
          %s263 = scalar_lea.vmem %s5, %s262
          %s264 = smul.u32 16, %s24
        $region40: #{tpu_custom_call.1} parent=31 // pred_fallthru
          _
        // Predicated region
        $region41: #{tpu_custom_call.1} parent=31 // pred_check
          %p265 = pneg %p184
        $region42: #{tpu_custom_call.1} parent=31 // pred_check_branch
          %267 = sbr.rel (%p265) target = $region44
        $region43: #{tpu_custom_call.1} parent=31 // pred_region
          %p268 = scmp.lt.s32.totalorder %s24, 1
          %s269 = scalar_select %p268, %s24, 1
          %s270 = scalar_lea.vmem %s6, %s269
        $region44: #{tpu_custom_call.1} parent=31 // pred_fallthru
          _
      $region32: #{tpu_custom_call.1} parent=5 // pred_fallthru
        _
      %p271 = scmp.le.s32.totalorder 1, %s16
      %p272 = scmp.lt.s32.totalorder %s16, 5
      %p273 = pnand %p271, %p272
      %p274 = pneg %p273
      // Predicated region
      $region45: #{tpu_custom_call.1} parent=5 // pred_check
        _
      $region46: #{tpu_custom_call.1} parent=5 // pred_check_branch
        %276 = sbr.rel (%p273) target = $region48
      $region47: #{tpu_custom_call.1} parent=5 // pred_region
        %s277 = ssub.s32 %s16, 1
        %p278 = scmp.lt.s32.totalorder %s25, 1
        %s279 = scalar_select %p278, %s25, 1
        %s280 = smul.addr %s279, 8
        %s281 = scalar_lea.vmem %s0, %s280
        %p282 = pneg %p54
        %p283 = pneg %p51
        %p284 = pneg %p75
        %p285 = pneg %p72
        %p286 = pneg %p96
        %p287 = pneg %p93
        %p288 = pneg %p117
        %p289 = pneg %p114
        %p290 = pneg %p138
        %p291 = pneg %p135
        %s292 = smul.u32 16, %s26
        %p293 = scmp.lt.s32.totalorder %s292, 31
        %s294 = scalar_select %p293, %s292, 31
        %s295 = smul.addr %s294, 8
        %s296 = scalar_lea.vmem %s5, %s295
        %p297 = pneg %p164
        %p298 = pneg %p161
        %p299 = scmp.lt.s32.totalorder %s26, 1
        %s300 = scalar_select %p299, %s26, 1
        %s301 = scalar_lea.vmem %s6, %s300
        %p302 = pneg %p190
        %p303 = pneg %p187
        %p304 = pneg %p218
        %p305 = pneg %p215
        %s306 = sand.u32 %s205, 1
        %s307 = scalar_lea.sflag [#allocation4], %s306
        %s308 = sand.u32 %s205, 1
        %s309 = smul.addr %s308, 8
        %s310 = scalar_lea.vmem [#allocation3], %s309
        %p311 = scmp.lt.s32.totalorder %s25, 1
        %s312 = scalar_select %p311, %s25, 1
        %s313 = smul.addr %s312, 8
        %s314 = scalar_lea.vmem %s0, %s313
        %s315 = smul.u32 16, %s26
        %p316 = scmp.lt.s32.totalorder %s315, 31
        %s317 = scalar_select %p316, %s315, 31
        %s318 = smul.addr %s317, 8
        %s319 = scalar_lea.vmem %s5, %s318
        %s320 = smul.u32 16, %s26
        %p321 = scmp.lt.s32.totalorder %s26, 1
        %s322 = scalar_select %p321, %s26, 1
        %s323 = scalar_lea.vmem %s6, %s322
        %p324 = scmp.eq.s32.totalorder %s26, 0
        // Predicated region
        $region49: #{tpu_custom_call.1} parent=47 // pred_check
          %p325 = pneg %p324
        $region50: #{tpu_custom_call.1} parent=47 // pred_check_branch
          %327 = sbr.rel (%p325) target = $region52
        $region51: #{tpu_custom_call.1} parent=47 // pred_region
          %v328 = vld [vmem:[%s314] sm:$0xff]
          %v329 = vld [vmem:[%s1] sm:$0xff]
          %v330 = vld [vmem:[%s1 + $0x8] sm:$0xff]
          %v331 = vld [vmem:[%s1 + $0x10] sm:$0xff]
          %v332 = vld [vmem:[%s1 + $0x18] sm:$0xff]
          %v333 = vld [vmem:[%s2] sm:$0x1]
          %v335 = vlaneseq
          %v336 = vshrl.u32 %v335, 7
          %v337 = vsub.s32 0, %v336
          %v338 = vrot.slane %v333, %v337
          %vm340 = vcmask 261120
          %v342 = vsel %vm340, %v328, 0
          %v345 = vsel %vm340, %v329, 0
          %v348 = vsel %vm340, %v330, 0
          %v351 = vsel %vm340, %v331, 0
          %v354 = vsel %vm340, %v332, 0
          %356 = vmatprep.subr.mxu0 0.0
          %357 = vmatpush1.xpose.msra.mxu0 %v345
          %358 = vmatprep.subr.mxu0 0.0
          %359 = vmatpush1.xpose.msra.mxu0 %v348
          %360 = vmatprep.subr.mxu0 0.0
          %361 = vmatpush1.xpose.msra.mxu0 %v351
          %362 = vmatprep.subr.mxu0 0.0
          %363 = vmatpush1.xpose.msra.mxu0 %v354
          %364 = vmatprep.subr.mxu0 0.0
          %365 = vmatpush1.xpose.msra.mxu0 0.0
          %366 = vmatprep.subr.mxu0 0.0
          %367 = vmatpush1.xpose.msra.mxu0 0.0
          %368 = vmatprep.subr.mxu0 0.0
          %369 = vmatpush1.xpose.msra.mxu0 0.0
          %370 = vmatprep.subr.mxu0 0.0
          %371 = vmatpush1.xpose.msra.mxu0 0.0
          %372 = vmatprep.subr.mxu0 0.0
          %373 = vmatpush1.xpose.msra.mxu0 0.0
          %374 = vmatprep.subr.mxu0 0.0
          %375 = vmatpush1.xpose.msra.mxu0 0.0
          %376 = vmatprep.subr.mxu0 0.0
          %377 = vmatpush1.xpose.msra.mxu0 0.0
          %378 = vmatprep.subr.mxu0 0.0
          %379 = vmatpush1.xpose.msra.mxu0 0.0
          %380 = vmatprep.subr.mxu0 0.0
          %381 = vmatpush1.xpose.msra.mxu0 0.0
          %382 = vmatprep.subr.mxu0 0.0
          %383 = vmatpush1.xpose.msra.mxu0 0.0
          %384 = vmatprep.subr.mxu0 0.0
          %385 = vmatpush1.xpose.msra.mxu0 0.0
          %386 = vmatprep.subr.mxu0 0.0
          %387 = vmatpush1.xpose.msra.mxu0 0.0
          %388 = vmatprep.subr.mxu0 0.0
          %389 = vmatpush1.xpose.msra.mxu0 0.0
          %390 = vmatprep.subr.mxu0 0.0
          %391 = vmatpush1.xpose.msra.mxu0 0.0
          %392 = vmatprep.subr.mxu0 0.0
          %393 = vmatpush1.xpose.msra.mxu0 0.0
          %394 = vmatprep.subr.mxu0 0.0
          %395 = vmatpush1.xpose.msra.mxu0 0.0
          %396 = vmatprep.subr.mxu0 0.0
          %397 = vmatpush1.xpose.msra.mxu0 0.0
          %398 = vmatprep.subr.mxu0 0.0
          %399 = vmatpush1.xpose.msra.mxu0 0.0
          %400 = vmatprep.subr.mxu0 0.0
          %401 = vmatpush1.xpose.msra.mxu0 0.0
          %402 = vmatprep.subr.mxu0 0.0
          %403 = vmatpush1.xpose.msra.mxu0 0.0
          %404 = vmatprep.subr.mxu0 0.0
          %405 = vmatpush1.xpose.msra.mxu0 0.0
          %406 = vmatprep.subr.mxu0 0.0
          %407 = vmatpush1.xpose.msra.mxu0 0.0
          %408 = vmatprep.subr.mxu0 0.0
          %409 = vmatpush1.xpose.msra.mxu0 0.0
          %410 = vmatprep.subr.mxu0 0.0
          %411 = vmatpush1.xpose.msra.mxu0 0.0
          %412 = vmatprep.subr.mxu0 0.0
          %413 = vmatpush1.xpose.msra.mxu0 0.0
          %414 = vmatprep.subr.mxu0 0.0
          %415 = vmatpush1.xpose.msra.mxu0 0.0
          %416 = vmatprep.subr.mxu0 0.0
          %417 = vmatpush1.xpose.msra.mxu0 0.0
          %418 = vmatprep.subr.mxu0 0.0
          %419 = vmatpush1.xpose.msra.mxu0 0.0
          %420 = vmatprep.mubr.f32.mxu0 0.0
          %421 = vmatmul.mubr.f32.gmra.mrb[0].mxu0 %v342
          %v422 = vpop.f32.mrb[0].mxu0
          %v423 = vadd.f32 %v338, %v422
          %v424 = vpop.f32.mrb[0].mxu0
          %425 = vdwg.mxu0
          %v426 = vmul.f32 %v423, 0.5
          %v427 = vmul.f32 %v423, 0.70710677
          %v428 = vand.u32 2147483647, %v427
          %v429 = vmul.f32 %v428, 0.3275911
          %v430 = vadd.f32 %v429, 1.0
          %v431 = vrcp.pop %v430
          %v432 = vmul.f32 1.0, %v431
          %v433 = vmul.f32 %v432, 1.0614054
          %v434 = vadd.f32 %v433, -1.4531521
          %v435 = vmul.f32 %v434, %v432
          %v436 = vadd.f32 %v435, 1.4214138
          %v437 = vmul.f32 %v436, %v432
          %v438 = vadd.f32 %v437, -0.28449672
          %v439 = vmul.f32 %v438, %v432
          %v440 = vadd.f32 %v439, 0.2548296
          %v441 = vmul.f32 %v440, %v432
          %v442 = vsub.f32 0.0, %v428
          %v443 = vmul.f32 %v442, %v428
          %v444 = vmul.f32 %v443, 1.442695
          %v445 = vpow.pop %v444
          %v446 = vmul.f32 %v441, %v445
          %v447 = vsub.f32 1.0, %v446
          %vm448 = vcmp.lt.f32.partialorder %v427, 0.0
          %v449 = vsub.f32 0.0, %v447
          %v450 = vsel %vm448, %v449, %v447
          %v451 = vadd.f32 %v450, 1.0
          %v452 = vmul.f32 %v426, %v451
          %v453 = vsel %vm340, %v452, 0.0
          %454 = vadd.xlane.f32.xlu0 %v453
          %v455 = vpop.xlane.xlu0 %454
          %v456 = vrcp.pop 32.0
          %v457 = vmul.f32 %v455, %v456
          %v458 = vsub.f32 %v452, %v457
          %v459 = vmul.f32 %v458, %v458
          %v460 = vsel %vm340, %v459, 0.0
          %461 = vadd.xlane.f32.xlu0 %v460
          %v462 = vpop.xlane.xlu0 %461
          %v463 = vmul.f32 %v462, %v456
          %v464 = vadd.f32 %v463, 1e-12
          %v465 = vrsqrt.pop %v464
          %v466 = vmul.f32 %v458, %v465
          %v467 = vld [vmem:[%s3] sm:$0x1]
          %v469 = vlaneseq
          %v470 = vshrl.u32 %v469, 7
          %v471 = vsub.s32 0, %v470
          %v472 = vrot.slane %v467, %v471
          %v474 = vmul.f32 %v466, %v472
          %v475 = vld [vmem:[%s4] sm:$0x1]
          %v477 = vlaneseq
          %v478 = vshrl.u32 %v477, 7
          %v479 = vsub.s32 0, %v478
          %v480 = vrot.slane %v475, %v479
          %v482 = vadd.f32 %v474, %v480
          %483 = vst.msk [vmem:[#allocation2] sm:$0xff] %vm340, %v482
        $region52: #{tpu_custom_call.1} parent=47 // pred_fallthru
          _
        %v484 = vld [vmem:[#allocation2] sm:$0xff]
        %v485 = vld [vmem:[%s319] sm:$0xff]
        %v486 = vld [vmem:[%s319 + $0x8] sm:$0xff]
        %v487 = vld [vmem:[%s319 + $0x10] sm:$0xff]
        %v488 = vld [vmem:[%s319 + $0x18] sm:$0xff]
        %v489 = vld [vmem:[%s319 + $0x20] sm:$0xff]
        %v490 = vld [vmem:[%s319 + $0x28] sm:$0xff]
        %v491 = vld [vmem:[%s319 + $0x30] sm:$0xff]
        %v492 = vld [vmem:[%s319 + $0x38] sm:$0xff]
        %v493 = vld [vmem:[%s319 + $0x40] sm:$0xff]
        %v494 = vld [vmem:[%s319 + $0x48] sm:$0xff]
        %v495 = vld [vmem:[%s319 + $0x50] sm:$0xff]
        %v496 = vld [vmem:[%s319 + $0x58] sm:$0xff]
        %v497 = vld [vmem:[%s319 + $0x60] sm:$0xff]
        %v498 = vld [vmem:[%s319 + $0x68] sm:$0xff]
        %v499 = vld [vmem:[%s319 + $0x70] sm:$0xff]
        %v500 = vld [vmem:[%s319 + $0x78] sm:$0xff]
        %v501 = vld [vmem:[%s323] sm:$0x1]
        %v503 = vlaneseq
        %v504 = vshrl.u32 %v503, 7
        %v505 = vsub.s32 0, %v504
        %v506 = vrot.slane %v501, %v505
        %vm508 = vcmask 261120
        %v510 = vsel %vm508, %v484, 0
        %v513 = vsel %vm508, %v485, 0
        %v516 = vsel %vm508, %v486, 0
        %v519 = vsel %vm508, %v487, 0
        %v522 = vsel %vm508, %v488, 0
        %v525 = vsel %vm508, %v489, 0
        %v528 = vsel %vm508, %v490, 0
        %v531 = vsel %vm508, %v491, 0
        %v534 = vsel %vm508, %v492, 0
        %v537 = vsel %vm508, %v493, 0
        %v540 = vsel %vm508, %v494, 0
        %v543 = vsel %vm508, %v495, 0
        %v546 = vsel %vm508, %v496, 0
        %v549 = vsel %vm508, %v497, 0
        %v552 = vsel %vm508, %v498, 0
        %v555 = vsel %vm508, %v499, 0
        %v558 = vsel %vm508, %v500, 0
        %560 = vmatprep.subr.mxu0 0.0
        %561 = vmatpush1.xpose.msra.mxu0 %v513
        %562 = vmatprep.subr.mxu0 0.0
        %563 = vmatpush1.xpose.msra.mxu0 %v516
        %564 = vmatprep.subr.mxu0 0.0
        %565 = vmatpush1.xpose.msra.mxu0 %v519
        %566 = vmatprep.subr.mxu0 0.0
        %567 = vmatpush1.xpose.msra.mxu0 %v522
        %568 = vmatprep.subr.mxu0 0.0
        %569 = vmatpush1.xpose.msra.mxu0 %v525
        %570 = vmatprep.subr.mxu0 0.0
        %571 = vmatpush1.xpose.msra.mxu0 %v528
        %572 = vmatprep.subr.mxu0 0.0
        %573 = vmatpush1.xpose.msra.mxu0 %v531
        %574 = vmatprep.subr.mxu0 0.0
        %575 = vmatpush1.xpose.msra.mxu0 %v534
        %576 = vmatprep.subr.mxu0 0.0
        %577 = vmatpush1.xpose.msra.mxu0 %v537
        %578 = vmatprep.subr.mxu0 0.0
        %579 = vmatpush1.xpose.msra.mxu0 %v540
        %580 = vmatprep.subr.mxu0 0.0
        %581 = vmatpush1.xpose.msra.mxu0 %v543
        %582 = vmatprep.subr.mxu0 0.0
        %583 = vmatpush1.xpose.msra.mxu0 %v546
        %584 = vmatprep.subr.mxu0 0.0
        %585 = vmatpush1.xpose.msra.mxu0 %v549
        %586 = vmatprep.subr.mxu0 0.0
        %587 = vmatpush1.xpose.msra.mxu0 %v552
        %588 = vmatprep.subr.mxu0 0.0
        %589 = vmatpush1.xpose.msra.mxu0 %v555
        %590 = vmatprep.subr.mxu0 0.0
        %591 = vmatpush1.xpose.msra.mxu0 %v558
        %592 = vmatprep.subr.mxu0 0.0
        %593 = vmatpush1.xpose.msra.mxu0 0.0
        %594 = vmatprep.subr.mxu0 0.0
        %595 = vmatpush1.xpose.msra.mxu0 0.0
        %596 = vmatprep.subr.mxu0 0.0
        %597 = vmatpush1.xpose.msra.mxu0 0.0
        %598 = vmatprep.subr.mxu0 0.0
        %599 = vmatpush1.xpose.msra.mxu0 0.0
        %600 = vmatprep.subr.mxu0 0.0
        %601 = vmatpush1.xpose.msra.mxu0 0.0
        %602 = vmatprep.subr.mxu0 0.0
        %603 = vmatpush1.xpose.msra.mxu0 0.0
        %604 = vmatprep.subr.mxu0 0.0
        %605 = vmatpush1.xpose.msra.mxu0 0.0
        %606 = vmatprep.subr.mxu0 0.0
        %607 = vmatpush1.xpose.msra.mxu0 0.0
        %608 = vmatprep.subr.mxu0 0.0
        %609 = vmatpush1.xpose.msra.mxu0 0.0
        %610 = vmatprep.subr.mxu0 0.0
        %611 = vmatpush1.xpose.msra.mxu0 0.0
        %612 = vmatprep.subr.mxu0 0.0
        %613 = vmatpush1.xpose.msra.mxu0 0.0
        %614 = vmatprep.subr.mxu0 0.0
        %615 = vmatpush1.xpose.msra.mxu0 0.0
        %616 = vmatprep.subr.mxu0 0.0
        %617 = vmatpush1.xpose.msra.mxu0 0.0
        %618 = vmatprep.subr.mxu0 0.0
        %619 = vmatpush1.xpose.msra.mxu0 0.0
        %620 = vmatprep.subr.mxu0 0.0
        %621 = vmatpush1.xpose.msra.mxu0 0.0
        %622 = vmatprep.subr.mxu0 0.0
        %623 = vmatpush1.xpose.msra.mxu0 0.0
        %624 = vmatprep.mubr.f32.mxu0 0.0
        %625 = vmatmul.mubr.f32.gmra.mrb[0].mxu0 %v510
        %v626 = vpop.f32.mrb[0].mxu0
        %v627 = vadd.f32 %v506, %v626
        %v628 = vpop.f32.mrb[0].mxu0
        %629 = vdwg.mxu0
        %630 = vst [vmem:[%s310] sm:$0xff] %v627
        %s631 = sand.u32 %s205, 1
        %s632 = scalar_lea.sflag [#allocation4], %s631
        %s633 = sand.u32 %s205, 1
        %s634 = smul.addr %s633, 8
        %s635 = scalar_lea.vmem [#allocation3], %s634
        // Predicated region
        $region53: #{tpu_custom_call.1} parent=47 // pred_check
          %p636 = pneg %p215
        $region54: #{tpu_custom_call.1} parent=47 // pred_check_branch
          %638 = sbr.rel (%p636) target = $region56
        $region55: #{tpu_custom_call.1} parent=47 // pred_region
          %s640 = ssub.s32 128, 128
          %641 = vsyncadd %s632, %s640
          %s642 = smul.addr %s25, 2
          %s643 = sadd.s32 %s26, %s642
          %s644 = smul.addr %s643, 128
          %s645 = scalar_lea.hbm %s7, %s644
          %s647 = sshll.u32 %s635, 4
          %s648 = int_to_ptr.vmem [resolvable:$true] %s647
          %650 = dma.vmem_to_hbm [thread:$0]  %s648, 128, %s645, %s632
        $region56: #{tpu_custom_call.1} parent=47 // pred_fallthru
          _
      $region48: #{tpu_custom_call.1} parent=5 // pred_fallthru
        _
      %p651 = scmp.le.s32.totalorder 2, %s16
      // Predicated region
      $region57: #{tpu_custom_call.1} parent=5 // pred_check
        %p652 = pneg %p651
      $region58: #{tpu_custom_call.1} parent=5 // pred_check_branch
        %654 = sbr.rel (%p652) target = $region60
      $region59: #{tpu_custom_call.1} parent=5 // pred_region
        %s655 = ssub.s32 %s16, 2
        // Predicated region
        $region61: #{tpu_custom_call.1} parent=59 // pred_check
          %p656 = pneg %p221
        $region62: #{tpu_custom_call.1} parent=59 // pred_check_branch
          %658 = sbr.rel (%p656) target = $region64
        $region63: #{tpu_custom_call.1} parent=59 // pred_region
          %s659 = sand.u32 %s206, 1
          %s660 = scalar_lea.sflag [#allocation4], %s659
          %s661 = sand.u32 %s206, 1
          %s662 = smul.addr %s661, 8
          %s663 = scalar_lea.vmem [#allocation3], %s662
          %664 = dma.done %s660, 128
        $region64: #{tpu_custom_call.1} parent=59 // pred_fallthru
          _
      $region60: #{tpu_custom_call.1} parent=5 // pred_fallthru
        _
    $region6: #{tpu_custom_call.1} parent=1 // loop_footer
      %s20 = sadd.s32 1, %s16
    $region7: #{tpu_custom_call.1} parent=1 // loop_footer_branch
      %15 = sbr.rel target = $region3
    $region8: #{tpu_custom_call.1} parent=1 // loop_exit
      _
    %665 = vsyncpa [#allocation4], 1
    %s666 = scalar_lea.sflag [#allocation4], 1
    %667 = vsyncpa %s666, 1

</llo_original>
